<compile_context>
chip_gen: v7x
topology: tpu7x:2x2x1
jax: 0.10.0
libtpu: 0.0.40
codegen_flags: <defaults>
</compile_context>

<pallas_src>
import functools

import jax
import jax.numpy as jnp
from jax.experimental import pallas as pl
from jax.experimental.pallas import tpu as pltpu

_LANE = 128
_SUBLANE = 8


def _round_up(x, m):
    return (x + m - 1) // m * m


def _balanced_tile(total, cap, align):
    """Split `total` (padded to `align`) into equal tiles of size ~<= cap."""
    total = _round_up(max(total, align), align)
    cap = max(align, _round_up(cap, align))
    n = -(-total // cap)
    tile = _round_up(-(-total // n), align)
    return tile, tile * n


def _tpu_hw():
    """Best-effort (vmem_capacity_bytes, is_v5e); never raises."""
    kind = ""
    try:
        kind = jax.devices()[0].device_kind.lower()
    except Exception:
        pass
    vmem = None
    try:
        vmem = int(pltpu.get_tpu_info().vmem_capacity_bytes)
    except Exception:
        vmem = None
    if vmem is None:
        if "v2" in kind or "v3" in kind:
            vmem = 16 * 1024 * 1024
        elif "v7" in kind or "7x" in kind:
            vmem = 64 * 1024 * 1024
        elif any(t in kind for t in ("v4", "v5", "v6")):
            vmem = 128 * 1024 * 1024
        else:
            vmem = 64 * 1024 * 1024
    is_v5e = ("v5 lite" in kind) or ("v5e" in kind) or ("v5litepod" in kind)
    return vmem, is_v5e


def _ffn_kernel(x_ref, w1_ref, b1_ref, w2_ref, b2_ref, o_ref, acc_ref=None):
    """One (row-tile i, out-tile n) block; hidden dim accumulated on axis 2."""
    acc = o_ref if acc_ref is None else acc_ref
    k = pl.program_id(2)

    @pl.when(k == 0)
    def _init():
        acc[...] = jnp.zeros_like(acc)

    # Linear 1 (hidden slice) on the MXU, native operand dtype, f32 accumulate.
    h = jnp.dot(x_ref[...], w1_ref[...], preferred_element_type=jnp.float32)
    # Bias + ReLU on the VPU (f32).
    h = jnp.maximum(h + b1_ref[...].astype(jnp.float32), 0.0)

    # Dropout(p=0.0) is the identity (module default / eval mode).
    # TODO(synk): training-mode dropout (p > 0) would need pltpu.prng_seed /
    # pltpu.prng_random_bits; not part of this forward pass.

    # Linear 2 partial product, accumulated over the hidden (k) axis.
    acc[...] += jnp.dot(h.astype(w2_ref.dtype), w2_ref[...],
                        preferred_element_type=jnp.float32)

    @pl.when(k == pl.num_programs(2) - 1)
    def _finalize():
        o_ref[...] = (acc[...] + b2_ref[...].astype(jnp.float32)
                      ).astype(o_ref.dtype)


@functools.partial(jax.jit,
                   static_argnames=("compute_dtype", "tm_max", "tk_max"))
def feed_forward(x, w1, b1, w2, b2, *, compute_dtype=None, tm_max=512,
                 tk_max=None):
    """FeedForward forward: relu(x @ W1 + b1) @ W2 + b2 (dropout p=0).

    x: (B, S, dim); w1: (dim, hidden); w2: (hidden, dim).
    compute_dtype: MXU operand dtype for x/W1/W2.  None -> bfloat16 for f32
    inputs (native MXU fast path), otherwise the input dtype.  Accumulation
    and bias adds are always f32; output keeps x.dtype.
    """
    B, S, dim = x.shape
    dim_in, hidden = w1.shape
    assert dim_in == dim and w2.shape == (hidden, dim)
    assert b1.shape == (hidden,) and b2.shape == (dim,)

    out_dtype = jnp.dtype(x.dtype)
    if compute_dtype is None:
        cd = jnp.dtype(jnp.bfloat16) if out_dtype == jnp.float32 else out_dtype
    else:
        cd = jnp.dtype(compute_dtype)
    cd_sz = cd.itemsize
    od_sz = out_dtype.itemsize
    b_sz = jnp.dtype(b1.dtype).itemsize

    vmem_cap, is_v5e = _tpu_hw()
    if tk_max is None:
        # v5e: fewer, larger k steps (single vector-store slot; cheap VMEM).
        tk_max = 1024 if is_v5e else 512
    headroom = min(16 * 1024 * 1024, vmem_cap // 4)
    budget = vmem_cap - headroom

    M = B * S
    Dk = _round_up(dim, _LANE)          # contraction dim of matmul-1

    def plan(tm_cap, tk_cap, tn_cap):
        tm, Mp = _balanced_tile(M, tm_cap, _SUBLANE)
        tk, Hp = _balanced_tile(hidden, tk_cap, _LANE)
        tn, Dn = _balanced_tile(dim, tn_cap, _LANE)
        return tm, Mp, tk, Hp, tn, Dn

    def need_bytes(tm, tk, tn):
        # Double-buffered pipeline blocks (+ f32 scratch only for sub-f32 out).
        n = 2 * cd_sz * (tm * Dk + Dk * tk + tk * tn)
        n += 2 * b_sz * _SUBLANE * (tk + tn)          # bias tiles (sublane pad)
        n += 2 * od_sz * tm * tn
        if out_dtype != jnp.dtype(jnp.float32):
            n += 4 * tm * tn
        return n + (2 << 20)                          # internal-scratch slack

    tm_cap, tk_cap, tn_cap = tm_max, tk_max, Dk
    tm, Mp, tk, Hp, tn, Dn = plan(tm_cap, tk_cap, tn_cap)
    for _ in range(64):                               # greedy shrink to fit
        if need_bytes(tm, tk, tn) <= budget:
            break
        if tk_cap > 256:
            tk_cap //= 2
        elif tn_cap > 256:
            tn_cap = max(256, tn_cap // 2)
        elif tm_cap > 64:
            tm_cap = max(64, tm_cap // 2)
        elif tn_cap > 128:
            tn_cap = 128
        elif tk_cap > 128:
            tk_cap = 128
        elif tm_cap > 8:
            tm_cap = max(8, tm_cap // 2)
        else:
            break
        tm, Mp, tk, Hp, tn, Dn = plan(tm_cap, tk_cap, tn_cap)

    grid = (Mp // tm, Dn // tn, Hp // tk)
    gi, gn, gk = grid

    def _prep(a, rows, cols, dtype):
        if a.dtype != dtype:
            a = a.astype(dtype)
        pr, pc = rows - a.shape[0], cols - a.shape[1]
        if pr or pc:
            a = jnp.pad(a, ((0, pr), (0, pc)))
        return a

    # Padded hidden columns contribute relu(x@0 + 0) @ 0 = 0; padded rows/cols
    # are sliced off afterwards.  No-op when already lane-aligned / same dtype.
    x2 = _prep(x.reshape(M, dim), Mp, Dk, cd)
    w1p = _prep(w1, Dk, Hp, cd)
    w2p = _prep(w2, Hp, Dn, cd)
    b1p = _prep(b1.reshape(1, hidden), 1, Hp, b1.dtype)
    b2p = _prep(b2.reshape(1, dim), 1, Dn, b2.dtype)

    # Weights are re-streamed once per row tile (and W1 once per out tile).
    flops = 2 * Mp * Dk * Hp * gn + 2 * Mp * Hp * Dn
    bytes_accessed = (cd_sz * (Mp * Dk + gi * gn * Dk * Hp + gi * Hp * Dn)
                      + b_sz * (Hp + Dn) + od_sz * Mp * Dn)
    cost = pl.CostEstimate(flops=int(flops), transcendentals=0,
                           bytes_accessed=int(bytes_accessed))

    if out_dtype == jnp.dtype(jnp.float32):
        scratch_shapes = []   # accumulate directly into the resident out block
    else:
        scratch_shapes = [pltpu.VMEM((tm, tn), jnp.float32)]

    out2 = pl.pallas_call(
        _ffn_kernel,
        out_shape=jax.ShapeDtypeStruct((Mp, Dn), out_dtype),
        grid_spec=pltpu.PrefetchScalarGridSpec(
            num_scalar_prefetch=0,
            grid=grid,
            in_specs=[
                pl.BlockSpec((tm, Dk), lambda i, n, k: (i, 0)),   # x (n/k-resident)
                pl.BlockSpec((Dk, tk), lambda i, n, k: (0, k)),   # W1 hidden slice
                pl.BlockSpec((1, tk), lambda i, n, k: (0, k)),    # b1 slice
                pl.BlockSpec((tk, tn), lambda i, n, k: (k, n)),   # W2 tile
                pl.BlockSpec((1, tn), lambda i, n, k: (0, n)),    # b2 slice
            ],
            out_specs=pl.BlockSpec((tm, tn), lambda i, n, k: (i, n)),
            scratch_shapes=scratch_shapes,
        ),
        compiler_params=pltpu.CompilerParams(
            dimension_semantics=("parallel", "parallel", "arbitrary"),
            vmem_limit_bytes=int(budget),
        ),
        cost_estimate=cost,
    )(x2, w1p, b1p, w2p, b2p)

    return out2[:M, :dim].reshape(B, S, dim)


def reference_ffn(x, w1, b1, w2, b2, compute_dtype=None):
    """Pure-JAX reference with the same operand-dtype discipline as the kernel."""
    out_dtype = jnp.dtype(x.dtype)
    if compute_dtype is None:
        cd = jnp.dtype(jnp.bfloat16) if out_dtype == jnp.float32 else out_dtype
    else:
        cd = jnp.dtype(compute_dtype)
    B, S, D = x.shape
    hp = jax.lax.Precision.HIGHEST
    x2 = x.reshape(B * S, D).astype(cd)
    h = jnp.dot(x2, w1.astype(cd), preferred_element_type=jnp.float32,
                precision=hp)
    h = jnp.maximum(h + b1.astype(jnp.float32), 0.0)
    y = jnp.dot(h.astype(cd), w2.astype(cd), preferred_element_type=jnp.float32,
                precision=hp)
    y = y + b2.astype(jnp.float32)
    return y.reshape(B, S, D).astype(out_dtype)


if __name__ == "__main__":
    root_key = jax.random.PRNGKey(0)

    def _make_inputs(case, B, S, dim, hidden, dtype):
        key = jax.random.fold_in(root_key, case)
        kx, kw1, kb1, kw2, kb2 = jax.random.split(key, 5)
        x = jax.random.normal(kx, (B, S, dim), dtype=jnp.float32).astype(dtype)
        w1 = (jax.random.normal(kw1, (dim, hidden), jnp.float32) * 0.1).astype(dtype)
        b1 = (jax.random.normal(kb1, (hidden,), jnp.float32) * 0.1).astype(dtype)
        w2 = (jax.random.normal(kw2, (hidden, dim), jnp.float32) * 0.1).astype(dtype)
        b2 = (jax.random.normal(kb2, (dim,), jnp.float32) * 0.1).astype(dtype)
        return x, w1, b1, w2, b2

    def _check(case, B, S, dim, hidden, *, dtype=jnp.float32, compute_dtype=None,
               atol, rtol):
        args = _make_inputs(case, B, S, dim, hidden, dtype)
        out = feed_forward(*args, compute_dtype=compute_dtype)
        jax.block_until_ready(out)
        ref = reference_ffn(*args, compute_dtype=compute_dtype)
        assert out.shape == (B, S, dim) and out.dtype == args[0].dtype
        of, rf = out.astype(jnp.float32), ref.astype(jnp.float32)
        err = float(jnp.max(jnp.abs(of - rf)))
        assert jnp.allclose(of, rf, atol=atol, rtol=rtol), ("max abs err:", err)

    # Exact-f32 path (small module-scale shape + multi-tile shape with padding,
    # multiple row tiles and hidden-axis accumulation).
    _check(0, 2, 8, 32, 64, compute_dtype=jnp.float32, atol=1e-4, rtol=1e-4)
    _check(1, 2, 384, 256, 1024, compute_dtype=jnp.float32, atol=2e-4, rtol=2e-4)
    # Default fast path: bf16 MXU operands, f32 accumulation, f32 in/out.
    _check(2, 2, 384, 256, 1024, compute_dtype=None, atol=2e-2, rtol=2e-2)
    # bf16 end-to-end (params + activations in bf16).
    _check(3, 2, 64, 128, 256, dtype=jnp.bfloat16, compute_dtype=None,
           atol=1e-1, rtol=5e-2)

    print("KERNEL_OK")
</pallas_src>

<mosaic_0001>
module attributes {stable_mosaic.version = 11 : i64} {
  func.func @_ffn_kernel(%arg0: i32, %arg1: i32, %arg2: i32, %arg3: memref<16x128xf32, #tpu.memory_space<vmem>>, %arg4: memref<128x128xf32, #tpu.memory_space<vmem>>, %arg5: memref<1x128xf32, #tpu.memory_space<vmem>>, %arg6: memref<128x128xf32, #tpu.memory_space<vmem>>, %arg7: memref<1x128xf32, #tpu.memory_space<vmem>>, %arg8: memref<16x128xf32, #tpu.memory_space<vmem>>) attributes {dimension_semantics = [#tpu.dimension_semantics<parallel>, #tpu.dimension_semantics<parallel>, #tpu.dimension_semantics<arbitrary>], iteration_bounds = array<i64: 1, 1, 1>, scalar_prefetch = 0 : i64, scratch_operands = 0 : i64, tpu.core_type = #tpu.core_type<tc>, window_params = [{transform_indices = @transform_0, window_bounds = array<i64: 16, 128>}, {transform_indices = @transform_1, window_bounds = array<i64: 128, 128>}, {transform_indices = @transform_2, window_bounds = array<i64: 1, 128>}, {transform_indices = @transform_3, window_bounds = array<i64: 128, 128>}, {transform_indices = @transform_4, window_bounds = array<i64: 1, 128>}, {transform_indices = @transform_5, window_bounds = array<i64: 16, 128>}]} {
    %c0_i32 = arith.constant 0 : i32
    %0 = arith.cmpi eq, %arg2, %c0_i32 : i32
    %1 = arith.extui %0 : i1 to i32
    %c0_i32_0 = arith.constant 0 : i32
    %2 = arith.cmpi ne, %1, %c0_i32_0 : i32
    scf.if %2 {
      %cst_16 = arith.constant 0.000000e+00 : f32
      %19 = vector.broadcast %cst_16 : f32 to vector<16x128xf32>
      %c0_17 = arith.constant 0 : index
      %c0_18 = arith.constant 0 : index
      %20 = vector.load %arg8[%c0_17, %c0_18] : memref<16x128xf32, #tpu.memory_space<vmem>>, vector<16x128xf32>
      tpu.vector_store %arg8[%c0_17, %c0_18], %19 {strides = array<i32>} : memref<16x128xf32, #tpu.memory_space<vmem>>, vector<16x128xf32>,
    } else {
    }
    %c0 = arith.constant 0 : index
    %c0_1 = arith.constant 0 : index
    %3 = vector.load %arg3[%c0, %c0_1] : memref<16x128xf32, #tpu.memory_space<vmem>>, vector<16x128xf32>
    %c0_2 = arith.constant 0 : index
    %c0_3 = arith.constant 0 : index
    %4 = vector.load %arg4[%c0_2, %c0_3] : memref<128x128xf32, #tpu.memory_space<vmem>>, vector<128x128xf32>
    %cst = arith.constant dense<0.000000e+00> : vector<16x128xf32>
    %5 = tpu.matmul %3, %4, %cst {dimension_numbers = #tpu.dot_dimension_numbers<[1], [0], [0], [1], [0, 0, 1, 1], [], []>} : vector<16x128xf32>, vector<128x128xf32>, vector<16x128xf32> -> vector<16x128xf32>
    %c0_4 = arith.constant 0 : index
    %c0_5 = arith.constant 0 : index
    %6 = vector.load %arg5[%c0_4, %c0_5] : memref<1x128xf32, #tpu.memory_space<vmem>>, vector<1x128xf32>
    %7 = vector.broadcast %6 : vector<1x128xf32> to vector<16x128xf32>
    %8 = arith.addf %5, %7 : vector<16x128xf32>
    %cst_6 = arith.constant 0.000000e+00 : f32
    %9 = vector.broadcast %cst_6 : f32 to vector<16x128xf32>
    %10 = arith.maximumf %8, %9 : vector<16x128xf32>
    %c0_7 = arith.constant 0 : index
    %c0_8 = arith.constant 0 : index
    %11 = vector.load %arg8[%c0_7, %c0_8] : memref<16x128xf32, #tpu.memory_space<vmem>>, vector<16x128xf32>
    %c0_9 = arith.constant 0 : index
    %c0_10 = arith.constant 0 : index
    %12 = vector.load %arg6[%c0_9, %c0_10] : memref<128x128xf32, #tpu.memory_space<vmem>>, vector<128x128xf32>
    %cst_11 = arith.constant dense<0.000000e+00> : vector<16x128xf32>
    %13 = tpu.matmul %10, %12, %cst_11 {dimension_numbers = #tpu.dot_dimension_numbers<[1], [0], [0], [1], [0, 0, 1, 1], [], []>} : vector<16x128xf32>, vector<128x128xf32>, vector<16x128xf32> -> vector<16x128xf32>
    %14 = arith.addf %11, %13 : vector<16x128xf32>
    %c0_12 = arith.constant 0 : index
    %c0_13 = arith.constant 0 : index
    %15 = vector.load %arg8[%c0_12, %c0_13] : memref<16x128xf32, #tpu.memory_space<vmem>>, vector<16x128xf32>
    tpu.vector_store %arg8[%c0_12, %c0_13], %14 {strides = array<i32>} : memref<16x128xf32, #tpu.memory_space<vmem>>, vector<16x128xf32>,
    %c0_i32_14 = arith.constant 0 : i32
    %16 = arith.cmpi eq, %arg2, %c0_i32_14 : i32
    %17 = arith.extui %16 : i1 to i32
    %c0_i32_15 = arith.constant 0 : i32
    %18 = arith.cmpi ne, %17, %c0_i32_15 : i32
    scf.if %18 {
      %c0_16 = arith.constant 0 : index
      %c0_17 = arith.constant 0 : index
      %19 = vector.load %arg8[%c0_16, %c0_17] : memref<16x128xf32, #tpu.memory_space<vmem>>, vector<16x128xf32>
      %c0_18 = arith.constant 0 : index
      %c0_19 = arith.constant 0 : index
      %20 = vector.load %arg7[%c0_18, %c0_19] : memref<1x128xf32, #tpu.memory_space<vmem>>, vector<1x128xf32>
      %21 = vector.broadcast %20 : vector<1x128xf32> to vector<16x128xf32>
      %22 = arith.addf %19, %21 : vector<16x128xf32>
      %c0_20 = arith.constant 0 : index
      %c0_21 = arith.constant 0 : index
      %23 = vector.load %arg8[%c0_20, %c0_21] : memref<16x128xf32, #tpu.memory_space<vmem>>, vector<16x128xf32>
      tpu.vector_store %arg8[%c0_20, %c0_21], %22 {strides = array<i32>} : memref<16x128xf32, #tpu.memory_space<vmem>>, vector<16x128xf32>,
    } else {
    }
    return
  }
  func.func @transform_0(%arg0: i32, %arg1: i32, %arg2: i32) -> (i32, i32) {
    %c0_i32 = arith.constant 0 : i32
    %c0_i32_0 = arith.constant 0 : i32
    return %arg0, %c0_i32 : i32, i32
  }
  func.func @transform_1(%arg0: i32, %arg1: i32, %arg2: i32) -> (i32, i32) {
    %c0_i32 = arith.constant 0 : i32
    %c0_i32_0 = arith.constant 0 : i32
    return %c0_i32, %arg2 : i32, i32
  }
  func.func @transform_2(%arg0: i32, %arg1: i32, %arg2: i32) -> (i32, i32) {
    %c0_i32 = arith.constant 0 : i32
    %c0_i32_0 = arith.constant 0 : i32
    return %c0_i32, %arg2 : i32, i32
  }
  func.func @transform_3(%arg0: i32, %arg1: i32, %arg2: i32) -> (i32, i32) {
    %c0_i32 = arith.constant 0 : i32
    return %arg2, %arg1 : i32, i32
  }
  func.func @transform_4(%arg0: i32, %arg1: i32, %arg2: i32) -> (i32, i32) {
    %c0_i32 = arith.constant 0 : i32
    %c0_i32_0 = arith.constant 0 : i32
    return %c0_i32, %arg1 : i32, i32
  }
  func.func @transform_5(%arg0: i32, %arg1: i32, %arg2: i32) -> (i32, i32) {
    %c0_i32 = arith.constant 0 : i32
    return %arg0, %arg1 : i32, i32
  }
}

</mosaic_0001>

<llo_original>
// kernel: feed_forward.1
$region0: #{feed_forward.1}
  #allocation0 [shape = 'u32[]', space=smem, size = 0x4, offset = 0x4, fixed_abs, tag = 'smem constant byte address 0x4 - core index']
  #allocation1 [shape = 'u32[144,128]{1,0:T(1,128)}', space=vmem, size = 0x12000, scoped, tag = 'internal scratch']
  %s0 = inlined_call_operand.vmem [shape: f32[16,128], index: 0, kind: input, shape index: {}]
  %s1 = inlined_call_operand.vmem [shape: f32[128,128], index: 1, kind: input, shape index: {}]
  %s2 = inlined_call_operand.vmem [shape: f32[1,128], index: 2, kind: input, shape index: {}]
  %s3 = inlined_call_operand.vmem [shape: f32[128,128], index: 3, kind: input, shape index: {}]
  %s4 = inlined_call_operand.vmem [shape: f32[1,128], index: 4, kind: input, shape index: {}]
  %s5 = inlined_call_operand.vmem [shape: f32[16,128], index: 5, kind: output, shape index: {}]
  %s6 = sld [smem:[#allocation0]]
  $region38: #{feed_forward.1} parent=0
    _
  %s8 = ssub.s32 1, %s6
  %s9 = scalar_select 0, %s8, %s6
  // Predicated region
  $region2: #{feed_forward.1} parent=0 // pred_check
    _
  $region3: #{feed_forward.1} parent=0 // pred_check_branch
    %11 = sbr.rel (0) target = $region5
  $region4: #{feed_forward.1} parent=0 // pred_region
    _
  $region5: #{feed_forward.1} parent=0 // pred_fallthru
    _
  // Predicated region
  $region6: #{feed_forward.1} parent=0 // pred_check
    _
  $region7: #{feed_forward.1} parent=0 // pred_check_branch
    %13 = sbr.rel (0) target = $region9
  $region8: #{feed_forward.1} parent=0 // pred_region
    _
  $region9: #{feed_forward.1} parent=0 // pred_fallthru
    _
  // Predicated region
  $region10: #{feed_forward.1} parent=0 // pred_check
    _
  $region11: #{feed_forward.1} parent=0 // pred_check_branch
    %15 = sbr.rel (0) target = $region13
  $region12: #{feed_forward.1} parent=0 // pred_region
    _
  $region13: #{feed_forward.1} parent=0 // pred_fallthru
    _
  // Predicated region
  $region14: #{feed_forward.1} parent=0 // pred_check
    _
  $region15: #{feed_forward.1} parent=0 // pred_check_branch
    %17 = sbr.rel (0) target = $region17
  $region16: #{feed_forward.1} parent=0 // pred_region
    _
  $region17: #{feed_forward.1} parent=0 // pred_fallthru
    _
  // Predicated region
  $region18: #{feed_forward.1} parent=0 // pred_check
    _
  $region19: #{feed_forward.1} parent=0 // pred_check_branch
    %19 = sbr.rel (0) target = $region21
  $region20: #{feed_forward.1} parent=0 // pred_region
    _
  $region21: #{feed_forward.1} parent=0 // pred_fallthru
    _
  %p20 = scmp.eq.s32.totalorder 0, 0
  // Predicated region
  $region22: #{feed_forward.1} parent=0 // pred_check
    %p21 = pneg %p20
  $region23: #{feed_forward.1} parent=0 // pred_check_branch
    %23 = sbr.rel (%p21) target = $region25
  $region24: #{feed_forward.1} parent=0 // pred_region
    %24 = vst [vmem:[%s5] sm:$0xff] 0.0
    %25 = vst [vmem:[%s5 + $0x8] sm:$0xff] 0.0
  $region25: #{feed_forward.1} parent=0 // pred_fallthru
    _
  %v26 = vld [vmem:[%s0] sm:$0xff]
  %v27 = vld [vmem:[%s0 + $0x8] sm:$0xff]
  %v28 = vld [vmem:[%s1] sm:$0xff]
  %v29 = vld [vmem:[%s1 + $0x8] sm:$0xff]
  %v30 = vld [vmem:[%s1 + $0x10] sm:$0xff]
  %v31 = vld [vmem:[%s1 + $0x18] sm:$0xff]
  %v32 = vld [vmem:[%s1 + $0x20] sm:$0xff]
  %v33 = vld [vmem:[%s1 + $0x28] sm:$0xff]
  %v34 = vld [vmem:[%s1 + $0x30] sm:$0xff]
  %v35 = vld [vmem:[%s1 + $0x38] sm:$0xff]
  %v36 = vld [vmem:[%s1 + $0x40] sm:$0xff]
  %v37 = vld [vmem:[%s1 + $0x48] sm:$0xff]
  %v38 = vld [vmem:[%s1 + $0x50] sm:$0xff]
  %v39 = vld [vmem:[%s1 + $0x58] sm:$0xff]
  %v40 = vld [vmem:[%s1 + $0x60] sm:$0xff]
  %v41 = vld [vmem:[%s1 + $0x68] sm:$0xff]
  %v42 = vld [vmem:[%s1 + $0x70] sm:$0xff]
  %v43 = vld [vmem:[%s1 + $0x78] sm:$0xff]
  %v44 = vld [vmem:[%s2] sm:$0x1]
  %v46 = vlaneseq
  %v47 = vshrl.u32 %v46, 7
  %v48 = vsub.s32 0, %v47
  %v49 = vrot.slane %v44, %v48
  %51 = vmatprep.subr.mxu0 0.0
  %52 = vmatpush1.msra.mxu0 %v28
  %53 = vmatprep.subr.mxu0 0.0
  %54 = vmatpush1.msra.mxu0 %v29
  %55 = vmatprep.subr.mxu0 0.0
  %56 = vmatpush1.msra.mxu0 %v30
  %57 = vmatprep.subr.mxu0 0.0
  %58 = vmatpush1.msra.mxu0 %v31
  %59 = vmatprep.subr.mxu0 0.0
  %60 = vmatpush1.msra.mxu0 %v32
  %61 = vmatprep.subr.mxu0 0.0
  %62 = vmatpush1.msra.mxu0 %v33
  %63 = vmatprep.subr.mxu0 0.0
  %64 = vmatpush1.msra.mxu0 %v34
  %65 = vmatprep.subr.mxu0 0.0
  %66 = vmatpush1.msra.mxu0 %v35
  %67 = vmatprep.subr.mxu0 0.0
  %68 = vmatpush1.msra.mxu0 %v36
  %69 = vmatprep.subr.mxu0 0.0
  %70 = vmatpush1.msra.mxu0 %v37
  %71 = vmatprep.subr.mxu0 0.0
  %72 = vmatpush1.msra.mxu0 %v38
  %73 = vmatprep.subr.mxu0 0.0
  %74 = vmatpush1.msra.mxu0 %v39
  %75 = vmatprep.subr.mxu0 0.0
  %76 = vmatpush1.msra.mxu0 %v40
  %77 = vmatprep.subr.mxu0 0.0
  %78 = vmatpush1.msra.mxu0 %v41
  %79 = vmatprep.subr.mxu0 0.0
  %80 = vmatpush1.msra.mxu0 %v42
  %81 = vmatprep.subr.mxu0 0.0
  %82 = vmatpush1.msra.mxu0 %v43
  %83 = vmatprep.subr.mxu0 0.0
  %84 = vmatpush1.msra.mxu0 0.0
  %85 = vmatprep.subr.mxu0 0.0
  %86 = vmatpush1.msra.mxu0 0.0
  %87 = vmatprep.subr.mxu0 0.0
  %88 = vmatpush1.msra.mxu0 0.0
  %89 = vmatprep.subr.mxu0 0.0
  %90 = vmatpush1.msra.mxu0 0.0
  %91 = vmatprep.subr.mxu0 0.0
  %92 = vmatpush1.msra.mxu0 0.0
  %93 = vmatprep.subr.mxu0 0.0
  %94 = vmatpush1.msra.mxu0 0.0
  %95 = vmatprep.subr.mxu0 0.0
  %96 = vmatpush1.msra.mxu0 0.0
  %97 = vmatprep.subr.mxu0 0.0
  %98 = vmatpush1.msra.mxu0 0.0
  %99 = vmatprep.subr.mxu0 0.0
  %100 = vmatpush1.msra.mxu0 0.0
  %101 = vmatprep.subr.mxu0 0.0
  %102 = vmatpush1.msra.mxu0 0.0
  %103 = vmatprep.subr.mxu0 0.0
  %104 = vmatpush1.msra.mxu0 0.0
  %105 = vmatprep.subr.mxu0 0.0
  %106 = vmatpush1.msra.mxu0 0.0
  %107 = vmatprep.subr.mxu0 0.0
  %108 = vmatpush1.msra.mxu0 0.0
  %109 = vmatprep.subr.mxu0 0.0
  %110 = vmatpush1.msra.mxu0 0.0
  %111 = vmatprep.subr.mxu0 0.0
  %112 = vmatpush1.msra.mxu0 0.0
  %113 = vmatprep.subr.mxu0 0.0
  %114 = vmatpush1.msra.mxu0 0.0
  %115 = vmatprep.mubr.f32.mxu0 0.0
  %116 = vmatmul.mubr.f32.gmra.mrb[0].mxu0 %v26
  %v117 = vpop.f32.mrb[0].mxu0
  %v118 = vadd.f32 %v49, %v117
  %v119 = vpop.f32.mrb[0].mxu0
  %120 = vmatprep.mubr.f32.mxu0 0.0
  %121 = vmatmul.mubr.f32.gmra.mrb[0].mxu0 %v27
  %v122 = vpop.f32.mrb[0].mxu0
  %v123 = vadd.f32 %v49, %v122
  %v124 = vpop.f32.mrb[0].mxu0
  %125 = vdwg.mxu0
  %v126 = vmax.f32 %v118, 0.0
  %v127 = vmax.f32 %v123, 0.0
  %v128 = vld [vmem:[%s5] sm:$0xff]
  %v129 = vld [vmem:[%s5 + $0x8] sm:$0xff]
  %v130 = vld [vmem:[%s3] sm:$0xff]
  %v131 = vld [vmem:[%s3 + $0x8] sm:$0xff]
  %v132 = vld [vmem:[%s3 + $0x10] sm:$0xff]
  %v133 = vld [vmem:[%s3 + $0x18] sm:$0xff]
  %v134 = vld [vmem:[%s3 + $0x20] sm:$0xff]
  %v135 = vld [vmem:[%s3 + $0x28] sm:$0xff]
  %v136 = vld [vmem:[%s3 + $0x30] sm:$0xff]
  %v137 = vld [vmem:[%s3 + $0x38] sm:$0xff]
  %v138 = vld [vmem:[%s3 + $0x40] sm:$0xff]
  %v139 = vld [vmem:[%s3 + $0x48] sm:$0xff]
  %v140 = vld [vmem:[%s3 + $0x50] sm:$0xff]
  %v141 = vld [vmem:[%s3 + $0x58] sm:$0xff]
  %v142 = vld [vmem:[%s3 + $0x60] sm:$0xff]
  %v143 = vld [vmem:[%s3 + $0x68] sm:$0xff]
  %v144 = vld [vmem:[%s3 + $0x70] sm:$0xff]
  %v145 = vld [vmem:[%s3 + $0x78] sm:$0xff]
  %146 = vmatprep.subr.mxu0 0.0
  %147 = vmatpush1.msra.mxu0 %v130
  %148 = vmatprep.subr.mxu0 0.0
  %149 = vmatpush1.msra.mxu0 %v131
  %150 = vmatprep.subr.mxu0 0.0
  %151 = vmatpush1.msra.mxu0 %v132
  %152 = vmatprep.subr.mxu0 0.0
  %153 = vmatpush1.msra.mxu0 %v133
  %154 = vmatprep.subr.mxu0 0.0
  %155 = vmatpush1.msra.mxu0 %v134
  %156 = vmatprep.subr.mxu0 0.0
  %157 = vmatpush1.msra.mxu0 %v135
  %158 = vmatprep.subr.mxu0 0.0
  %159 = vmatpush1.msra.mxu0 %v136
  %160 = vmatprep.subr.mxu0 0.0
  %161 = vmatpush1.msra.mxu0 %v137
  %162 = vmatprep.subr.mxu0 0.0
  %163 = vmatpush1.msra.mxu0 %v138
  %164 = vmatprep.subr.mxu0 0.0
  %165 = vmatpush1.msra.mxu0 %v139
  %166 = vmatprep.subr.mxu0 0.0
  %167 = vmatpush1.msra.mxu0 %v140
  %168 = vmatprep.subr.mxu0 0.0
  %169 = vmatpush1.msra.mxu0 %v141
  %170 = vmatprep.subr.mxu0 0.0
  %171 = vmatpush1.msra.mxu0 %v142
  %172 = vmatprep.subr.mxu0 0.0
  %173 = vmatpush1.msra.mxu0 %v143
  %174 = vmatprep.subr.mxu0 0.0
  %175 = vmatpush1.msra.mxu0 %v144
  %176 = vmatprep.subr.mxu0 0.0
  %177 = vmatpush1.msra.mxu0 %v145
  %178 = vmatprep.subr.mxu0 0.0
  %179 = vmatpush1.msra.mxu0 0.0
  %180 = vmatprep.subr.mxu0 0.0
  %181 = vmatpush1.msra.mxu0 0.0
  %182 = vmatprep.subr.mxu0 0.0
  %183 = vmatpush1.msra.mxu0 0.0
  %184 = vmatprep.subr.mxu0 0.0
  %185 = vmatpush1.msra.mxu0 0.0
  %186 = vmatprep.subr.mxu0 0.0
  %187 = vmatpush1.msra.mxu0 0.0
  %188 = vmatprep.subr.mxu0 0.0
  %189 = vmatpush1.msra.mxu0 0.0
  %190 = vmatprep.subr.mxu0 0.0
  %191 = vmatpush1.msra.mxu0 0.0
  %192 = vmatprep.subr.mxu0 0.0
  %193 = vmatpush1.msra.mxu0 0.0
  %194 = vmatprep.subr.mxu0 0.0
  %195 = vmatpush1.msra.mxu0 0.0
  %196 = vmatprep.subr.mxu0 0.0
  %197 = vmatpush1.msra.mxu0 0.0
  %198 = vmatprep.subr.mxu0 0.0
  %199 = vmatpush1.msra.mxu0 0.0
  %200 = vmatprep.subr.mxu0 0.0
  %201 = vmatpush1.msra.mxu0 0.0
  %202 = vmatprep.subr.mxu0 0.0
  %203 = vmatpush1.msra.mxu0 0.0
  %204 = vmatprep.subr.mxu0 0.0
  %205 = vmatpush1.msra.mxu0 0.0
  %206 = vmatprep.subr.mxu0 0.0
  %207 = vmatpush1.msra.mxu0 0.0
  %208 = vmatprep.subr.mxu0 0.0
  %209 = vmatpush1.msra.mxu0 0.0
  %210 = vmatprep.mubr.f32.mxu0 0.0
  %211 = vmatmul.mubr.f32.gmra.mrb[0].mxu0 %v126
  %v212 = vpop.f32.mrb[0].mxu0
  %v213 = vadd.f32 0.0, %v212
  %v214 = vpop.f32.mrb[0].mxu0
  %215 = vmatprep.mubr.f32.mxu0 0.0
  %216 = vmatmul.mubr.f32.gmra.mrb[0].mxu0 %v127
  %v217 = vpop.f32.mrb[0].mxu0
  %v218 = vadd.f32 0.0, %v217
  %v219 = vpop.f32.mrb[0].mxu0
  %220 = vdwg.mxu0
  %v221 = vadd.f32 %v128, %v213
  %v222 = vadd.f32 %v129, %v218
  %223 = vst [vmem:[%s5] sm:$0xff] %v221
  %224 = vst [vmem:[%s5 + $0x8] sm:$0xff] %v222
  // Predicated region
  $region26: #{feed_forward.1} parent=0 // pred_check
    %p225 = pneg %p20
  $region27: #{feed_forward.1} parent=0 // pred_check_branch
    %227 = sbr.rel (%p225) target = $region29
  $region28: #{feed_forward.1} parent=0 // pred_region
    %v228 = vld [vmem:[%s5] sm:$0xff]
    %v229 = vld [vmem:[%s5 + $0x8] sm:$0xff]
    %v230 = vld [vmem:[%s4] sm:$0x1]
    %v232 = vlaneseq
    %v233 = vshrl.u32 %v232, 7
    %v234 = vsub.s32 0, %v233
    %v235 = vrot.slane %v230, %v234
    %v237 = vadd.f32 %v228, %v235
    %v238 = vadd.f32 %v229, %v235
    %239 = vst [vmem:[%s5] sm:$0xff] %v237
    %240 = vst [vmem:[%s5 + $0x8] sm:$0xff] %v238
  $region29: #{feed_forward.1} parent=0 // pred_fallthru
    _
  // Predicated region
  $region30: #{feed_forward.1} parent=0 // pred_check
    _
  $region31: #{feed_forward.1} parent=0 // pred_check_branch
    %242 = sbr.rel (0) target = $region33
  $region32: #{feed_forward.1} parent=0 // pred_region
    _
  $region33: #{feed_forward.1} parent=0 // pred_fallthru
    _
  // Predicated region
  $region34: #{feed_forward.1} parent=0 // pred_check
    _
  $region35: #{feed_forward.1} parent=0 // pred_check_branch
    %244 = sbr.rel (0) target = $region37
  $region36: #{feed_forward.1} parent=0 // pred_region
    _
  $region37: #{feed_forward.1} parent=0 // pred_fallthru
    _

</llo_original>
